<compile_context>
chip_gen: v7x
topology: tpu7x:2x2x1
jax: 0.10.0
libtpu: 0.0.40
codegen_flags: <defaults>
</compile_context>

<pallas_src>
import jax
import jax.numpy as jnp
from jax.experimental import pallas as pl
from jax.experimental.pallas import tpu as pltpu


def _round_up(v, m):
    return (v + m - 1) // m * m


def _softplus(z):
    # torch.nn.Softplus(beta=1, threshold=20): z if z > 20 else log1p(exp(z)).
    # The unselected exp() branch can only overflow to +inf (never NaN), so a
    # single where with no extra clamp is sufficient.
    return jnp.where(z > 20.0, z, jnp.log1p(jnp.exp(z)))


def _mlp_kernel(x_ref,
                w1_ref, b1_ref,
                w2_ref, b2_ref,
                w3_ref, b3_ref,
                w4_ref, b4_ref,
                o_ref):
    # f32 x loaded from HBM, cast to bf16 on the VPU (free slot); bf16 MXU
    # operands with f32 accumulation; softplus / bias adds in f32.
    x = x_ref[...].astype(jnp.bfloat16)

    h = jnp.dot(x, w1_ref[...],
                preferred_element_type=jnp.float32) + b1_ref[...]
    h = _softplus(h)

    h = jnp.dot(h.astype(jnp.bfloat16), w2_ref[...],
                preferred_element_type=jnp.float32) + b2_ref[...]
    h = _softplus(h)

    h = jnp.dot(h.astype(jnp.bfloat16), w3_ref[...],
                preferred_element_type=jnp.float32) + b3_ref[...]
    h = _softplus(h)

    out = jnp.dot(h.astype(jnp.bfloat16), w4_ref[...],
                  preferred_element_type=jnp.float32) + b4_ref[...]
    # Narrow (x_out-lane) store; vst slot is far from saturated so the mask
    # is free, and we avoid writing padded columns to HBM.
    o_ref[...] = out.astype(o_ref.dtype)


def model_latent_f(x, params, *, tile_n=None):
    """Forward pass of ModelLatentF via a single Pallas kernel.

    Args:
      x: [N, x_in] float32 input.
      params: dict with w1..w4 stored [in, out] and b1..b4 stored [1, out] (f32).
      tile_n: rows per grid step (multiple of 8). None -> auto.
    Returns:
      [N, x_out] float32 output.
    """
    N, x_in = x.shape
    H = params["w1"].shape[1]
    x_out = params["w4"].shape[1]

    if tile_n is None:
        if N <= 256:
            tile_n = N                       # single whole-array block below
        else:
            # >= 2 tiles (so both v7x TensorCores get work), <= 4096 rows per
            # tile, and the tile size is chosen to minimize last-tile padding.
            num_tiles = max(2, -(-N // 4096))
            tile_n = min(4096, _round_up(-(-N // num_tiles), 256))
    else:
        assert tile_n % 8 == 0, "tile_n must be a multiple of 8 (f32 sublanes)"

    n_pad = _round_up(N, tile_n)
    num_tiles = n_pad // tile_n

    # bf16 weights for the MXU (f32 accumulation in-kernel); biases stay f32
    # (added to the f32 accumulator). Weights are ~50 KB total.
    w1 = params["w1"].astype(jnp.bfloat16)
    w2 = params["w2"].astype(jnp.bfloat16)
    w3 = params["w3"].astype(jnp.bfloat16)
    w4 = params["w4"].astype(jnp.bfloat16)
    b1, b2, b3, b4 = params["b1"], params["b2"], params["b3"], params["b4"]

    # Output stays f32 to match the torch module.
    # TODO(synk): optionally emit bf16 output if downstream consumers tolerate
    # it (halves the remaining output write traffic).

    if num_tiles == 1:
        # Tiny batch: single whole-array block, no grid / pipeline bookkeeping
        # and no padding (full-array block shapes are exempt from the (8,128)
        # divisibility rule).
        return pl.pallas_call(
            _mlp_kernel,
            out_shape=jax.ShapeDtypeStruct((N, x_out), jnp.float32),
        )(x, w1, b1, w2, b2, w3, b3, w4, b4)

    # Pad batch only when N is not already a tile multiple (padding rows are
    # sliced off at the end; rows are independent, so no numerics impact).
    x_p = x if n_pad == N else jnp.pad(x, ((0, n_pad - N), (0, 0)))

    def const_spec(shape):
        # Constant block index -> DMA'd into VMEM once, reused every step.
        return pl.BlockSpec(shape, lambda i: (0, 0))

    grid_spec = pltpu.PrefetchScalarGridSpec(
        num_scalar_prefetch=0,
        grid=(num_tiles,),
        in_specs=[
            pl.BlockSpec((tile_n, x_in), lambda i: (i, 0)),   # x tile (f32)
            const_spec((x_in, H)), const_spec((1, H)),        # layer 1
            const_spec((H, H)), const_spec((1, H)),           # layer 2
            const_spec((H, H)), const_spec((1, H)),           # layer 3
            const_spec((H, x_out)), const_spec((1, x_out)),   # layer 4
        ],
        out_specs=pl.BlockSpec((tile_n, x_out), lambda i: (i, 0)),
    )
    out = pl.pallas_call(
        _mlp_kernel,
        out_shape=jax.ShapeDtypeStruct((n_pad, x_out), jnp.float32),
        grid_spec=grid_spec,
        compiler_params=pltpu.CompilerParams(
            dimension_semantics=("parallel",)),
    )(x_p, w1, b1, w2, b2, w3, b3, w4, b4)

    return out if n_pad == N else out[:N]


def init_params(key, x_in, H, x_out):
    """Deterministic init mimicking torch.nn.Linear default U(-1/sqrt(in), 1/sqrt(in))."""
    dims = [(x_in, H), (H, H), (H, H), (H, x_out)]
    params = {}
    for idx, (fan_in, fan_out) in enumerate(dims, start=1):
        key, kw, kb = jax.random.split(key, 3)
        bound = 1.0 / jnp.sqrt(fan_in)
        params[f"w{idx}"] = jax.random.uniform(
            kw, (fan_in, fan_out), jnp.float32, -bound, bound)
        params[f"b{idx}"] = jax.random.uniform(
            kb, (1, fan_out), jnp.float32, -bound, bound)
    return params


def _reference(x, params, *, bf16_operands):
    """Pure-JAX reference. bf16_operands=True mirrors the kernel's numerics."""
    cast = (lambda a: a.astype(jnp.bfloat16)) if bf16_operands else (lambda a: a)
    h = cast(x)
    for idx in range(1, 5):
        z = jnp.dot(h, cast(params[f"w{idx}"]),
                    preferred_element_type=jnp.float32) + params[f"b{idx}"]
        if idx < 4:
            z = jnp.where(z > 20.0, z, jnp.log1p(jnp.exp(z)))
            h = cast(z)
        else:
            h = z
    return h


if __name__ == "__main__":
    # Small shapes consistent with ModelLatentF(x_in, H, x_out).
    X_IN, H, X_OUT = 32, 64, 32

    key = jax.random.PRNGKey(0)
    kx, kp = jax.random.split(key)
    params = init_params(kp, X_IN, H, X_OUT)

    run = jax.jit(model_latent_f, static_argnames=("tile_n",))

    # (1) Tiny batch -> single-block (no-grid) path.
    x_small = jax.random.normal(kx, (16, X_IN), dtype=jnp.float32)
    out_small = jax.block_until_ready(run(x_small, params))

    # (2) Mid batch, not a tile multiple -> auto tiler: 2 tiles of 256 rows
    #     (padded to 512), exercising the "parallel" grid path.
    x_mid = jax.random.normal(kx, (300, X_IN), dtype=jnp.float32)
    out_mid = jax.block_until_ready(run(x_mid, params))

    # (3) User-supplied tile_n with a ragged last tile.
    x_big = jax.random.normal(kx, (520, X_IN), dtype=jnp.float32)
    out_big = jax.block_until_ready(run(x_big, params, tile_n=256))

    for x_t, out_t in ((x_small, out_small), (x_mid, out_mid), (x_big, out_big)):
        assert out_t.shape == (x_t.shape[0], X_OUT)
        ref_bf = _reference(x_t, params, bf16_operands=True)
        assert jnp.allclose(out_t, ref_bf, atol=2e-2, rtol=2e-2), \
            "mismatch vs bf16-operand reference"
        ref_f32 = _reference(x_t, params, bf16_operands=False)
        assert jnp.allclose(out_t, ref_f32, atol=1e-1, rtol=1e-1), \
            "mismatch vs f32 reference"

    print("KERNEL_OK")
</pallas_src>

<mosaic_0001>
module attributes {stable_mosaic.version = 11 : i64} {
  func.func @_mlp_kernel(%arg0: memref<16x32xf32, #tpu.memory_space<vmem>>, %arg1: memref<32x64xbf16, #tpu.memory_space<vmem>>, %arg2: memref<1x64xf32, #tpu.memory_space<vmem>>, %arg3: memref<64x64xbf16, #tpu.memory_space<vmem>>, %arg4: memref<1x64xf32, #tpu.memory_space<vmem>>, %arg5: memref<64x64xbf16, #tpu.memory_space<vmem>>, %arg6: memref<1x64xf32, #tpu.memory_space<vmem>>, %arg7: memref<64x32xbf16, #tpu.memory_space<vmem>>, %arg8: memref<1x32xf32, #tpu.memory_space<vmem>>, %arg9: memref<16x32xf32, #tpu.memory_space<vmem>>) attributes {dimension_semantics = [], scalar_prefetch = 0 : i64, scratch_operands = 0 : i64, tpu.core_type = #tpu.core_type<tc>} {
    %c0 = arith.constant 0 : index
    %c0_0 = arith.constant 0 : index
    %0 = vector.load %arg0[%c0, %c0_0] : memref<16x32xf32, #tpu.memory_space<vmem>>, vector<16x32xf32>
    %1 = arith.truncf %0 : vector<16x32xf32> to vector<16x32xbf16>
    %c0_1 = arith.constant 0 : index
    %c0_2 = arith.constant 0 : index
    %2 = vector.load %arg1[%c0_1, %c0_2] : memref<32x64xbf16, #tpu.memory_space<vmem>>, vector<32x64xbf16>
    %cst = arith.constant dense<0.000000e+00> : vector<16x64xf32>
    %3 = tpu.matmul %1, %2, %cst {dimension_numbers = #tpu.dot_dimension_numbers<[1], [0], [0], [1], [0, 0, 1, 1], [], []>} : vector<16x32xbf16>, vector<32x64xbf16>, vector<16x64xf32> -> vector<16x64xf32>
    %c0_3 = arith.constant 0 : index
    %c0_4 = arith.constant 0 : index
    %4 = vector.load %arg2[%c0_3, %c0_4] : memref<1x64xf32, #tpu.memory_space<vmem>>, vector<1x64xf32>
    %5 = vector.broadcast %4 : vector<1x64xf32> to vector<16x64xf32>
    %6 = arith.addf %3, %5 : vector<16x64xf32>
    %cst_5 = arith.constant 2.000000e+01 : f32
    %7 = vector.broadcast %cst_5 : f32 to vector<16x64xf32>
    %8 = arith.cmpf ogt, %6, %7 : vector<16x64xf32>
    %9 = math.exp %6 : vector<16x64xf32>
    %10 = math.log1p %9 : vector<16x64xf32>
    %11 = arith.select %8, %6, %10 : vector<16x64xi1>, vector<16x64xf32>
    %12 = arith.truncf %11 : vector<16x64xf32> to vector<16x64xbf16>
    %c0_6 = arith.constant 0 : index
    %c0_7 = arith.constant 0 : index
    %13 = vector.load %arg3[%c0_6, %c0_7] : memref<64x64xbf16, #tpu.memory_space<vmem>>, vector<64x64xbf16>
    %cst_8 = arith.constant dense<0.000000e+00> : vector<16x64xf32>
    %14 = tpu.matmul %12, %13, %cst_8 {dimension_numbers = #tpu.dot_dimension_numbers<[1], [0], [0], [1], [0, 0, 1, 1], [], []>} : vector<16x64xbf16>, vector<64x64xbf16>, vector<16x64xf32> -> vector<16x64xf32>
    %c0_9 = arith.constant 0 : index
    %c0_10 = arith.constant 0 : index
    %15 = vector.load %arg4[%c0_9, %c0_10] : memref<1x64xf32, #tpu.memory_space<vmem>>, vector<1x64xf32>
    %16 = vector.broadcast %15 : vector<1x64xf32> to vector<16x64xf32>
    %17 = arith.addf %14, %16 : vector<16x64xf32>
    %cst_11 = arith.constant 2.000000e+01 : f32
    %18 = vector.broadcast %cst_11 : f32 to vector<16x64xf32>
    %19 = arith.cmpf ogt, %17, %18 : vector<16x64xf32>
    %20 = math.exp %17 : vector<16x64xf32>
    %21 = math.log1p %20 : vector<16x64xf32>
    %22 = arith.select %19, %17, %21 : vector<16x64xi1>, vector<16x64xf32>
    %23 = arith.truncf %22 : vector<16x64xf32> to vector<16x64xbf16>
    %c0_12 = arith.constant 0 : index
    %c0_13 = arith.constant 0 : index
    %24 = vector.load %arg5[%c0_12, %c0_13] : memref<64x64xbf16, #tpu.memory_space<vmem>>, vector<64x64xbf16>
    %cst_14 = arith.constant dense<0.000000e+00> : vector<16x64xf32>
    %25 = tpu.matmul %23, %24, %cst_14 {dimension_numbers = #tpu.dot_dimension_numbers<[1], [0], [0], [1], [0, 0, 1, 1], [], []>} : vector<16x64xbf16>, vector<64x64xbf16>, vector<16x64xf32> -> vector<16x64xf32>
    %c0_15 = arith.constant 0 : index
    %c0_16 = arith.constant 0 : index
    %26 = vector.load %arg6[%c0_15, %c0_16] : memref<1x64xf32, #tpu.memory_space<vmem>>, vector<1x64xf32>
    %27 = vector.broadcast %26 : vector<1x64xf32> to vector<16x64xf32>
    %28 = arith.addf %25, %27 : vector<16x64xf32>
    %cst_17 = arith.constant 2.000000e+01 : f32
    %29 = vector.broadcast %cst_17 : f32 to vector<16x64xf32>
    %30 = arith.cmpf ogt, %28, %29 : vector<16x64xf32>
    %31 = math.exp %28 : vector<16x64xf32>
    %32 = math.log1p %31 : vector<16x64xf32>
    %33 = arith.select %30, %28, %32 : vector<16x64xi1>, vector<16x64xf32>
    %34 = arith.truncf %33 : vector<16x64xf32> to vector<16x64xbf16>
    %c0_18 = arith.constant 0 : index
    %c0_19 = arith.constant 0 : index
    %35 = vector.load %arg7[%c0_18, %c0_19] : memref<64x32xbf16, #tpu.memory_space<vmem>>, vector<64x32xbf16>
    %cst_20 = arith.constant dense<0.000000e+00> : vector<16x32xf32>
    %36 = tpu.matmul %34, %35, %cst_20 {dimension_numbers = #tpu.dot_dimension_numbers<[1], [0], [0], [1], [0, 0, 1, 1], [], []>} : vector<16x64xbf16>, vector<64x32xbf16>, vector<16x32xf32> -> vector<16x32xf32>
    %c0_21 = arith.constant 0 : index
    %c0_22 = arith.constant 0 : index
    %37 = vector.load %arg8[%c0_21, %c0_22] : memref<1x32xf32, #tpu.memory_space<vmem>>, vector<1x32xf32>
    %38 = vector.broadcast %37 : vector<1x32xf32> to vector<16x32xf32>
    %39 = arith.addf %36, %38 : vector<16x32xf32>
    %c0_23 = arith.constant 0 : index
    %c0_24 = arith.constant 0 : index
    %40 = vector.load %arg9[%c0_23, %c0_24] : memref<16x32xf32, #tpu.memory_space<vmem>>, vector<16x32xf32>
    tpu.vector_store %arg9[%c0_23, %c0_24], %39 {strides = array<i32>} : memref<16x32xf32, #tpu.memory_space<vmem>>, vector<16x32xf32>,
    return
  }
}

</mosaic_0001>

<llo_original>
// kernel: model_latent_f.1
$region0: #{model_latent_f.1}
  #allocation0 [shape = 'u32[]', space=smem, size = 0x4, offset = 0x4, fixed_abs, tag = 'smem constant byte address 0x4 - core index']
  #allocation1 [shape = 'u32[144,128]{1,0:T(1,128)}', space=vmem, size = 0x12000, scoped, tag = 'internal scratch']
  %s0 = inlined_call_operand.vmem [shape: f32[16,32], index: 0, kind: input, shape index: {}]
  %s1 = inlined_call_operand.vmem [shape: bf16[32,64], index: 1, kind: input, shape index: {}]
  %s2 = inlined_call_operand.vmem [shape: f32[1,64], index: 2, kind: input, shape index: {}]
  %s3 = inlined_call_operand.vmem [shape: bf16[64,64], index: 3, kind: input, shape index: {}]
  %s4 = inlined_call_operand.vmem [shape: f32[1,64], index: 4, kind: input, shape index: {}]
  %s5 = inlined_call_operand.vmem [shape: bf16[64,64], index: 5, kind: input, shape index: {}]
  %s6 = inlined_call_operand.vmem [shape: f32[1,64], index: 6, kind: input, shape index: {}]
  %s7 = inlined_call_operand.vmem [shape: bf16[64,32], index: 7, kind: input, shape index: {}]
  %s8 = inlined_call_operand.vmem [shape: f32[1,32], index: 8, kind: input, shape index: {}]
  %s9 = inlined_call_operand.hbm [shape: f32[16,32], index: 9, kind: output, shape index: {}]
  %s10 = sld [smem:[#allocation0]]
  $region46: #{model_latent_f.1} parent=0
    _
  %s12 = ssub.s32 1, %s10
  %s13 = scalar_select 0, %s12, %s10
  $region1: #{model_latent_f.1} parent=0
    #allocation2 [shape = 'u8[8192]{0}', space=vmem, size = 0x2000, scoped, tag = 'output window, operand 0, single buffered']
    #allocation3 [shape = 's32[1]{0}', space=sflag, size = 0x4, scoped, tag = 'scoped memory for model_latent_f.1']
    %14 = vsyncpa [#allocation3], 0
    // Predicated region
    $region2: #{model_latent_f.1} parent=1 // pred_check
      _
    $region3: #{model_latent_f.1} parent=1 // pred_check_branch
      %16 = sbr.rel (0) target = $region5
    $region4: #{model_latent_f.1} parent=1 // pred_region
      _
    $region5: #{model_latent_f.1} parent=1 // pred_fallthru
      _
    // Predicated region
    $region6: #{model_latent_f.1} parent=1 // pred_check
      _
    $region7: #{model_latent_f.1} parent=1 // pred_check_branch
      %18 = sbr.rel (0) target = $region9
    $region8: #{model_latent_f.1} parent=1 // pred_region
      _
    $region9: #{model_latent_f.1} parent=1 // pred_fallthru
      _
    // Predicated region
    $region10: #{model_latent_f.1} parent=1 // pred_check
      _
    $region11: #{model_latent_f.1} parent=1 // pred_check_branch
      %20 = sbr.rel (0) target = $region13
    $region12: #{model_latent_f.1} parent=1 // pred_region
      _
    $region13: #{model_latent_f.1} parent=1 // pred_fallthru
      _
    // Predicated region
    $region14: #{model_latent_f.1} parent=1 // pred_check
      _
    $region15: #{model_latent_f.1} parent=1 // pred_check_branch
      %22 = sbr.rel (0) target = $region17
    $region16: #{model_latent_f.1} parent=1 // pred_region
      _
    $region17: #{model_latent_f.1} parent=1 // pred_fallthru
      _
    // Predicated region
    $region18: #{model_latent_f.1} parent=1 // pred_check
      _
    $region19: #{model_latent_f.1} parent=1 // pred_check_branch
      %24 = sbr.rel (0) target = $region21
    $region20: #{model_latent_f.1} parent=1 // pred_region
      _
    $region21: #{model_latent_f.1} parent=1 // pred_fallthru
      _
    // Predicated region
    $region22: #{model_latent_f.1} parent=1 // pred_check
      _
    $region23: #{model_latent_f.1} parent=1 // pred_check_branch
      %26 = sbr.rel (0) target = $region25
    $region24: #{model_latent_f.1} parent=1 // pred_region
      _
    $region25: #{model_latent_f.1} parent=1 // pred_fallthru
      _
    // Predicated region
    $region26: #{model_latent_f.1} parent=1 // pred_check
      _
    $region27: #{model_latent_f.1} parent=1 // pred_check_branch
      %28 = sbr.rel (0) target = $region29
    $region28: #{model_latent_f.1} parent=1 // pred_region
      _
    $region29: #{model_latent_f.1} parent=1 // pred_fallthru
      _
    // Predicated region
    $region30: #{model_latent_f.1} parent=1 // pred_check
      _
    $region31: #{model_latent_f.1} parent=1 // pred_check_branch
      %30 = sbr.rel (0) target = $region33
    $region32: #{model_latent_f.1} parent=1 // pred_region
      _
    $region33: #{model_latent_f.1} parent=1 // pred_fallthru
      _
    // Predicated region
    $region34: #{model_latent_f.1} parent=1 // pred_check
      _
    $region35: #{model_latent_f.1} parent=1 // pred_check_branch
      %32 = sbr.rel (0) target = $region37
    $region36: #{model_latent_f.1} parent=1 // pred_region
      _
    $region37: #{model_latent_f.1} parent=1 // pred_fallthru
      _
    %v34 = vld [vmem:[%s0] sm:$0xff]
    %v35 = vld [vmem:[%s0 + $0x8] sm:$0xff]
    %v36 = vpack.c.bf16 %v35, %v34
    %v37 = vld [vmem:[%s1] sm:$0xf]
    %v38 = vld [vmem:[%s1 + $0x4] sm:$0xf]
    %v39 = vld [vmem:[%s1 + $0x8] sm:$0xf]
    %v40 = vld [vmem:[%s1 + $0xc] sm:$0xf]
    %v41 = vld [vmem:[%s2] sm:$0x1]
    %v43 = vlaneseq
    %v44 = vshrl.u32 %v43, 7
    %v45 = vsub.s32 0, %v44
    %v46 = vrot.slane %v41, %v45
    %v52 = vunpack.c.l.b16 %v37
    %v53 = vunpack.c.l.b16 %v38
    %v54 = vunpack.c.l.b16 %v39
    %v55 = vunpack.c.l.b16 %v40
    %v56 = vpack.c.b16 %v53, %v52
    %v57 = vpack.c.b16 %v55, %v54
    %vm60 = vcmask 261120
    %v62 = vsel %vm60, %v36, 0
    %64 = vmatprep.subr.bf16.mxu0 0
    %65 = vmatpush1.bf16.msra.mxu0 %v56
    %66 = vmatprep.subr.bf16.mxu0 0
    %67 = vmatpush1.bf16.msra.mxu0 %v57
    %68 = vmatprep.subr.bf16.mxu0 0
    %69 = vmatpush1.bf16.msra.mxu0 0
    %70 = vmatprep.subr.bf16.mxu0 0
    %71 = vmatpush1.bf16.msra.mxu0 0
    %72 = vmatprep.subr.bf16.mxu0 0
    %73 = vmatpush1.bf16.msra.mxu0 0
    %74 = vmatprep.subr.bf16.mxu0 0
    %75 = vmatpush1.bf16.msra.mxu0 0
    %76 = vmatprep.subr.bf16.mxu0 0
    %77 = vmatpush1.bf16.msra.mxu0 0
    %78 = vmatprep.subr.bf16.mxu0 0
    %79 = vmatpush1.bf16.msra.mxu0 0
    %80 = vmatprep.subr.bf16.mxu0 0
    %81 = vmatpush1.bf16.msra.mxu0 0
    %82 = vmatprep.subr.bf16.mxu0 0
    %83 = vmatpush1.bf16.msra.mxu0 0
    %84 = vmatprep.subr.bf16.mxu0 0
    %85 = vmatpush1.bf16.msra.mxu0 0
    %86 = vmatprep.subr.bf16.mxu0 0
    %87 = vmatpush1.bf16.msra.mxu0 0
    %88 = vmatprep.subr.bf16.mxu0 0
    %89 = vmatpush1.bf16.msra.mxu0 0
    %90 = vmatprep.subr.bf16.mxu0 0
    %91 = vmatpush1.bf16.msra.mxu0 0
    %92 = vmatprep.subr.bf16.mxu0 0
    %93 = vmatpush1.bf16.msra.mxu0 0
    %94 = vmatprep.subr.bf16.mxu0 0
    %95 = vmatpush1.bf16.msra.mxu0 0
    %96 = vmatprep.mubr.bf16.mxu0 0
    %97 = vmatmul.mubr.bf16.gmra.mrb[0].mxu0 %v62
    %v98 = vpop.f32.mrb[0].mxu0
    %v99 = vadd.f32 %v46, %v98
    %v100 = vpop.f32.mrb[0].mxu0
    %v101 = vpop.f32.mrb[0].mxu0
    %v102 = vadd.f32 %v46, %v101
    %v103 = vpop.f32.mrb[0].mxu0
    %104 = vdwg.mxu0
    %vm105 = vcmp.gt.f32.partialorder %v99, 20.0
    %vm106 = vcmp.gt.f32.partialorder %v102, 20.0
    %v107 = vmul.f32 %v99, 1.442695
    %v108 = vpow.pop %v107
    %v109 = vmul.f32 %v102, 1.442695
    %v110 = vpow.pop %v109
    %v111 = vadd.f32 %v108, 1.0
    %v112 = vlog2.pop %v111
    %v113 = vmul.f32 %v112, 0.6931472
    %v114 = vmul.f32 -0.5, %v108
    %v115 = vadd.f32 %v114, 1.0
    %v116 = vmul.f32 %v115, %v108
    %v117 = vand.u32 2147483647, %v108
    %vm118 = vcmp.lt.f32.partialorder %v117, 0.0004427343
    %v119 = vsel %vm118, %v116, %v113
    %v120 = vadd.f32 %v110, 1.0
    %v121 = vlog2.pop %v120
    %v122 = vmul.f32 %v121, 0.6931472
    %v123 = vmul.f32 -0.5, %v110
    %v124 = vadd.f32 %v123, 1.0
    %v125 = vmul.f32 %v124, %v110
    %v126 = vand.u32 2147483647, %v110
    %vm127 = vcmp.lt.f32.partialorder %v126, 0.0004427343
    %v128 = vsel %vm127, %v125, %v122
    %v129 = vsel %vm105, %v99, %v119
    %v130 = vsel %vm106, %v102, %v128
    %v131 = vpack.c.bf16 %v130, %v129
    %v132 = vld [vmem:[%s3] sm:$0xf]
    %v133 = vld [vmem:[%s3 + $0x4] sm:$0xf]
    %v134 = vld [vmem:[%s3 + $0x8] sm:$0xf]
    %v135 = vld [vmem:[%s3 + $0xc] sm:$0xf]
    %v136 = vld [vmem:[%s3 + $0x10] sm:$0xf]
    %v137 = vld [vmem:[%s3 + $0x14] sm:$0xf]
    %v138 = vld [vmem:[%s3 + $0x18] sm:$0xf]
    %v139 = vld [vmem:[%s3 + $0x1c] sm:$0xf]
    %v140 = vld [vmem:[%s4] sm:$0x1]
    %v142 = vlaneseq
    %v143 = vshrl.u32 %v142, 7
    %v144 = vsub.s32 0, %v143
    %v145 = vrot.slane %v140, %v144
    %v155 = vunpack.c.l.b16 %v132
    %v156 = vunpack.c.l.b16 %v133
    %v157 = vunpack.c.l.b16 %v134
    %v158 = vunpack.c.l.b16 %v135
    %v159 = vunpack.c.l.b16 %v136
    %v160 = vunpack.c.l.b16 %v137
    %v161 = vunpack.c.l.b16 %v138
    %v162 = vunpack.c.l.b16 %v139
    %v163 = vpack.c.b16 %v156, %v155
    %v164 = vpack.c.b16 %v158, %v157
    %v165 = vpack.c.b16 %v160, %v159
    %v166 = vpack.c.b16 %v162, %v161
    %vm171 = vcmask 523264
    %v173 = vsel %vm171, %v131, 0
    %175 = vmatprep.subr.bf16.mxu0 0
    %176 = vmatpush1.bf16.msra.mxu0 %v163
    %177 = vmatprep.subr.bf16.mxu0 0
    %178 = vmatpush1.bf16.msra.mxu0 %v164
    %179 = vmatprep.subr.bf16.mxu0 0
    %180 = vmatpush1.bf16.msra.mxu0 %v165
    %181 = vmatprep.subr.bf16.mxu0 0
    %182 = vmatpush1.bf16.msra.mxu0 %v166
    %183 = vmatprep.subr.bf16.mxu0 0
    %184 = vmatpush1.bf16.msra.mxu0 0
    %185 = vmatprep.subr.bf16.mxu0 0
    %186 = vmatpush1.bf16.msra.mxu0 0
    %187 = vmatprep.subr.bf16.mxu0 0
    %188 = vmatpush1.bf16.msra.mxu0 0
    %189 = vmatprep.subr.bf16.mxu0 0
    %190 = vmatpush1.bf16.msra.mxu0 0
    %191 = vmatprep.subr.bf16.mxu0 0
    %192 = vmatpush1.bf16.msra.mxu0 0
    %193 = vmatprep.subr.bf16.mxu0 0
    %194 = vmatpush1.bf16.msra.mxu0 0
    %195 = vmatprep.subr.bf16.mxu0 0
    %196 = vmatpush1.bf16.msra.mxu0 0
    %197 = vmatprep.subr.bf16.mxu0 0
    %198 = vmatpush1.bf16.msra.mxu0 0
    %199 = vmatprep.subr.bf16.mxu0 0
    %200 = vmatpush1.bf16.msra.mxu0 0
    %201 = vmatprep.subr.bf16.mxu0 0
    %202 = vmatpush1.bf16.msra.mxu0 0
    %203 = vmatprep.subr.bf16.mxu0 0
    %204 = vmatpush1.bf16.msra.mxu0 0
    %205 = vmatprep.subr.bf16.mxu0 0
    %206 = vmatpush1.bf16.msra.mxu0 0
    %207 = vmatprep.mubr.bf16.mxu0 0
    %208 = vmatmul.mubr.bf16.gmra.mrb[0].mxu0 %v173
    %v209 = vpop.f32.mrb[0].mxu0
    %v210 = vadd.f32 %v145, %v209
    %v211 = vpop.f32.mrb[0].mxu0
    %v212 = vpop.f32.mrb[0].mxu0
    %v213 = vadd.f32 %v145, %v212
    %v214 = vpop.f32.mrb[0].mxu0
    %215 = vdwg.mxu0
    %vm216 = vcmp.gt.f32.partialorder %v210, 20.0
    %vm217 = vcmp.gt.f32.partialorder %v213, 20.0
    %v218 = vmul.f32 %v210, 1.442695
    %v219 = vpow.pop %v218
    %v220 = vmul.f32 %v213, 1.442695
    %v221 = vpow.pop %v220
    %v222 = vadd.f32 %v219, 1.0
    %v223 = vlog2.pop %v222
    %v224 = vmul.f32 %v223, 0.6931472
    %v225 = vmul.f32 -0.5, %v219
    %v226 = vadd.f32 %v225, 1.0
    %v227 = vmul.f32 %v226, %v219
    %v228 = vand.u32 2147483647, %v219
    %vm229 = vcmp.lt.f32.partialorder %v228, 0.0004427343
    %v230 = vsel %vm229, %v227, %v224
    %v231 = vadd.f32 %v221, 1.0
    %v232 = vlog2.pop %v231
    %v233 = vmul.f32 %v232, 0.6931472
    %v234 = vmul.f32 -0.5, %v221
    %v235 = vadd.f32 %v234, 1.0
    %v236 = vmul.f32 %v235, %v221
    %v237 = vand.u32 2147483647, %v221
    %vm238 = vcmp.lt.f32.partialorder %v237, 0.0004427343
    %v239 = vsel %vm238, %v236, %v233
    %v240 = vsel %vm216, %v210, %v230
    %v241 = vsel %vm217, %v213, %v239
    %v242 = vpack.c.bf16 %v241, %v240
    %v243 = vld [vmem:[%s5] sm:$0xf]
    %v244 = vld [vmem:[%s5 + $0x4] sm:$0xf]
    %v245 = vld [vmem:[%s5 + $0x8] sm:$0xf]
    %v246 = vld [vmem:[%s5 + $0xc] sm:$0xf]
    %v247 = vld [vmem:[%s5 + $0x10] sm:$0xf]
    %v248 = vld [vmem:[%s5 + $0x14] sm:$0xf]
    %v249 = vld [vmem:[%s5 + $0x18] sm:$0xf]
    %v250 = vld [vmem:[%s5 + $0x1c] sm:$0xf]
    %v251 = vld [vmem:[%s6] sm:$0x1]
    %v253 = vlaneseq
    %v254 = vshrl.u32 %v253, 7
    %v255 = vsub.s32 0, %v254
    %v256 = vrot.slane %v251, %v255
    %v266 = vunpack.c.l.b16 %v243
    %v267 = vunpack.c.l.b16 %v244
    %v268 = vunpack.c.l.b16 %v245
    %v269 = vunpack.c.l.b16 %v246
    %v270 = vunpack.c.l.b16 %v247
    %v271 = vunpack.c.l.b16 %v248
    %v272 = vunpack.c.l.b16 %v249
    %v273 = vunpack.c.l.b16 %v250
    %v274 = vpack.c.b16 %v267, %v266
    %v275 = vpack.c.b16 %v269, %v268
    %v276 = vpack.c.b16 %v271, %v270
    %v277 = vpack.c.b16 %v273, %v272
    %v283 = vsel %vm171, %v242, 0
    %285 = vmatprep.subr.bf16.mxu0 0
    %286 = vmatpush1.bf16.msra.mxu0 %v274
    %287 = vmatprep.subr.bf16.mxu0 0
    %288 = vmatpush1.bf16.msra.mxu0 %v275
    %289 = vmatprep.subr.bf16.mxu0 0
    %290 = vmatpush1.bf16.msra.mxu0 %v276
    %291 = vmatprep.subr.bf16.mxu0 0
    %292 = vmatpush1.bf16.msra.mxu0 %v277
    %293 = vmatprep.subr.bf16.mxu0 0
    %294 = vmatpush1.bf16.msra.mxu0 0
    %295 = vmatprep.subr.bf16.mxu0 0
    %296 = vmatpush1.bf16.msra.mxu0 0
    %297 = vmatprep.subr.bf16.mxu0 0
    %298 = vmatpush1.bf16.msra.mxu0 0
    %299 = vmatprep.subr.bf16.mxu0 0
    %300 = vmatpush1.bf16.msra.mxu0 0
    %301 = vmatprep.subr.bf16.mxu0 0
    %302 = vmatpush1.bf16.msra.mxu0 0
    %303 = vmatprep.subr.bf16.mxu0 0
    %304 = vmatpush1.bf16.msra.mxu0 0
    %305 = vmatprep.subr.bf16.mxu0 0
    %306 = vmatpush1.bf16.msra.mxu0 0
    %307 = vmatprep.subr.bf16.mxu0 0
    %308 = vmatpush1.bf16.msra.mxu0 0
    %309 = vmatprep.subr.bf16.mxu0 0
    %310 = vmatpush1.bf16.msra.mxu0 0
    %311 = vmatprep.subr.bf16.mxu0 0
    %312 = vmatpush1.bf16.msra.mxu0 0
    %313 = vmatprep.subr.bf16.mxu0 0
    %314 = vmatpush1.bf16.msra.mxu0 0
    %315 = vmatprep.subr.bf16.mxu0 0
    %316 = vmatpush1.bf16.msra.mxu0 0
    %317 = vmatprep.mubr.bf16.mxu0 0
    %318 = vmatmul.mubr.bf16.gmra.mrb[0].mxu0 %v283
    %v319 = vpop.f32.mrb[0].mxu0
    %v320 = vadd.f32 %v256, %v319
    %v321 = vpop.f32.mrb[0].mxu0
    %v322 = vpop.f32.mrb[0].mxu0
    %v323 = vadd.f32 %v256, %v322
    %v324 = vpop.f32.mrb[0].mxu0
    %325 = vdwg.mxu0
    %vm326 = vcmp.gt.f32.partialorder %v320, 20.0
    %vm327 = vcmp.gt.f32.partialorder %v323, 20.0
    %v328 = vmul.f32 %v320, 1.442695
    %v329 = vpow.pop %v328
    %v330 = vmul.f32 %v323, 1.442695
    %v331 = vpow.pop %v330
    %v332 = vadd.f32 %v329, 1.0
    %v333 = vlog2.pop %v332
    %v334 = vmul.f32 %v333, 0.6931472
    %v335 = vmul.f32 -0.5, %v329
    %v336 = vadd.f32 %v335, 1.0
    %v337 = vmul.f32 %v336, %v329
    %v338 = vand.u32 2147483647, %v329
    %vm339 = vcmp.lt.f32.partialorder %v338, 0.0004427343
    %v340 = vsel %vm339, %v337, %v334
    %v341 = vadd.f32 %v331, 1.0
    %v342 = vlog2.pop %v341
    %v343 = vmul.f32 %v342, 0.6931472
    %v344 = vmul.f32 -0.5, %v331
    %v345 = vadd.f32 %v344, 1.0
    %v346 = vmul.f32 %v345, %v331
    %v347 = vand.u32 2147483647, %v331
    %vm348 = vcmp.lt.f32.partialorder %v347, 0.0004427343
    %v349 = vsel %vm348, %v346, %v343
    %v350 = vsel %vm326, %v320, %v340
    %v351 = vsel %vm327, %v323, %v349
    %v352 = vpack.c.bf16 %v351, %v350
    %v353 = vld [vmem:[%s7] sm:$0xf]
    %v354 = vld [vmem:[%s7 + $0x4] sm:$0xf]
    %v355 = vld [vmem:[%s7 + $0x8] sm:$0xf]
    %v356 = vld [vmem:[%s7 + $0xc] sm:$0xf]
    %v357 = vld [vmem:[%s7 + $0x10] sm:$0xf]
    %v358 = vld [vmem:[%s7 + $0x14] sm:$0xf]
    %v359 = vld [vmem:[%s7 + $0x18] sm:$0xf]
    %v360 = vld [vmem:[%s7 + $0x1c] sm:$0xf]
    %v361 = vld [vmem:[%s8] sm:$0x1]
    %v363 = vlaneseq
    %v364 = vshrl.u32 %v363, 7
    %v365 = vsub.s32 0, %v364
    %v366 = vrot.slane %v361, %v365
    %v376 = vunpack.c.l.b16 %v353
    %v377 = vunpack.c.l.b16 %v354
    %v378 = vunpack.c.l.b16 %v355
    %v379 = vunpack.c.l.b16 %v356
    %v380 = vunpack.c.l.b16 %v357
    %v381 = vunpack.c.l.b16 %v358
    %v382 = vunpack.c.l.b16 %v359
    %v383 = vunpack.c.l.b16 %v360
    %v384 = vpack.c.b16 %v377, %v376
    %v385 = vpack.c.b16 %v379, %v378
    %v386 = vpack.c.b16 %v381, %v380
    %v387 = vpack.c.b16 %v383, %v382
    %v393 = vsel %vm171, %v352, 0
    %395 = vmatprep.subr.bf16.mxu0 0
    %396 = vmatpush1.bf16.msra.mxu0 %v384
    %397 = vmatprep.subr.bf16.mxu0 0
    %398 = vmatpush1.bf16.msra.mxu0 %v385
    %399 = vmatprep.subr.bf16.mxu0 0
    %400 = vmatpush1.bf16.msra.mxu0 %v386
    %401 = vmatprep.subr.bf16.mxu0 0
    %402 = vmatpush1.bf16.msra.mxu0 %v387
    %403 = vmatprep.subr.bf16.mxu0 0
    %404 = vmatpush1.bf16.msra.mxu0 0
    %405 = vmatprep.subr.bf16.mxu0 0
    %406 = vmatpush1.bf16.msra.mxu0 0
    %407 = vmatprep.subr.bf16.mxu0 0
    %408 = vmatpush1.bf16.msra.mxu0 0
    %409 = vmatprep.subr.bf16.mxu0 0
    %410 = vmatpush1.bf16.msra.mxu0 0
    %411 = vmatprep.subr.bf16.mxu0 0
    %412 = vmatpush1.bf16.msra.mxu0 0
    %413 = vmatprep.subr.bf16.mxu0 0
    %414 = vmatpush1.bf16.msra.mxu0 0
    %415 = vmatprep.subr.bf16.mxu0 0
    %416 = vmatpush1.bf16.msra.mxu0 0
    %417 = vmatprep.subr.bf16.mxu0 0
    %418 = vmatpush1.bf16.msra.mxu0 0
    %419 = vmatprep.subr.bf16.mxu0 0
    %420 = vmatpush1.bf16.msra.mxu0 0
    %421 = vmatprep.subr.bf16.mxu0 0
    %422 = vmatpush1.bf16.msra.mxu0 0
    %423 = vmatprep.subr.bf16.mxu0 0
    %424 = vmatpush1.bf16.msra.mxu0 0
    %425 = vmatprep.subr.bf16.mxu0 0
    %426 = vmatpush1.bf16.msra.mxu0 0
    %427 = vmatprep.mubr.bf16.mxu0 0
    %428 = vmatmul.mubr.bf16.gmra.mrb[0].mxu0 %v393
    %v429 = vpop.f32.mrb[0].mxu0
    %v430 = vadd.f32 %v366, %v429
    %v431 = vpop.f32.mrb[0].mxu0
    %v432 = vpop.f32.mrb[0].mxu0
    %v433 = vadd.f32 %v366, %v432
    %v434 = vpop.f32.mrb[0].mxu0
    %435 = vdwg.mxu0
    %436 = vst.msk [vmem:[#allocation2] sm:$0xff] %vm60, %v430
    %437 = vst.msk [vmem:[#allocation2 + $0x8] sm:$0xff] %vm60, %v433
    // Predicated region
    $region38: #{model_latent_f.1} parent=1 // pred_check
      _
    $region39: #{model_latent_f.1} parent=1 // pred_check_branch
      %439 = sbr.rel (0) target = $region41
    $region40: #{model_latent_f.1} parent=1 // pred_region
      %s441 = ssub.s32 256, 256
      %442 = vsyncadd [#allocation3], %s441
      %s443 = sshll.u32 [#allocation2], 4
      %s444 = int_to_ptr.vmem [resolvable:$true] %s443
      %449 = dma.vmem_to_hbm [thread:$0]  %s444, 256, %s9, [#allocation3], 128, 128, 8
    $region41: #{model_latent_f.1} parent=1 // pred_fallthru
      _
    // Predicated region
    $region42: #{model_latent_f.1} parent=1 // pred_check
      _
    $region43: #{model_latent_f.1} parent=1 // pred_check_branch
      %451 = sbr.rel (0) target = $region45
    $region44: #{model_latent_f.1} parent=1 // pred_region
      %452 = dma.done [#allocation3], 256
    $region45: #{model_latent_f.1} parent=1 // pred_fallthru
      _
    %453 = vsyncpa [#allocation3], 1

</llo_original>
